<compile_context>
chip_gen: v7x
topology: tpu7x:2x2x1
jax: 0.10.0
libtpu: 0.0.40
codegen_flags: <defaults>
</compile_context>

<pallas_src>
import jax
import jax.numpy as jnp
from jax import lax
from jax.experimental import pallas as pl
from jax.experimental.pallas import tpu as pltpu


def _head_kernel(x_ref, w1_ref, b1_ref, w2_ref, b2_ref, o_ref, acc_ref):
    # x_ref:   [Bp, TK]  bf16  CLS activations, K-tile
    # w1_ref:  [H,  TK]  bf16  dense weight, PyTorch [out, in] layout, K-tile (streamed)
    # b1_ref:  [1,  H]   f32   dense bias (resident)
    # w2_ref:  [Lp, H]   bf16  out_proj weight, PyTorch [out, in] layout (resident)
    # b2_ref:  [1,  Lp]  f32   out_proj bias (resident)
    # o_ref:   [Bp, Lp]  f32   padded logits
    # acc_ref: [Bp, H]   f32   running x @ W1.T accumulator
    k = pl.program_id(0)

    @pl.when(k == 0)
    def _init():
        acc_ref[...] = jnp.zeros_like(acc_ref)

    # Partial contraction over this K tile: x[:, ks] @ W1[:, ks].T -> [Bp, H]
    acc_ref[...] += lax.dot_general(
        x_ref[...], w1_ref[...],
        dimension_numbers=(((1,), (1,)), ((), ())),
        preferred_element_type=jnp.float32,
    )

    @pl.when(k == pl.num_programs(0) - 1)
    def _finalize():
        # bias + tanh (tanh goes to the EUP slot — effectively free here).
        h = jnp.tanh(acc_ref[...] + b1_ref[...])
        out = lax.dot_general(
            h.astype(w2_ref.dtype), w2_ref[...],
            dimension_numbers=(((1,), (1,)), ((), ())),
            preferred_element_type=jnp.float32,
        ) + b2_ref[...]
        o_ref[...] = out.astype(o_ref.dtype)


def _round_up(x, m):
    return (x + m - 1) // m * m


def _pick_tk(h):
    # K-tile for the W1 stream: a multiple of 128 lanes when possible,
    # otherwise the full dim (full-extent blocks are always legal).
    for tk in (512, 256, 128):
        if h > tk and h % tk == 0:
            return tk
    return h


def tex_classification_head(features, w_dense, b_dense, w_out, b_out):
    """features: [B, S, H]; weights in PyTorch nn.Linear layout
    (w_dense: [H, H], b_dense: [H], w_out: [L, H], b_out: [L]).
    Returns logits [B, L] in features.dtype.

    Weights are streamed as bf16 (a no-op cast if they were converted once at
    model-load time); accumulation is f32.
    """
    B, S, H = features.shape
    L = w_out.shape[0]

    TK = _pick_tk(H)
    k_tiles = H // TK
    Bp = _round_up(B, 8)                # sublane-dense batch
    Lp = _round_up(max(L, 128), 128)    # lane-dense label dim

    # Glue (tiny vs. the weight stream): CLS slice + pad to dense vreg tiles.
    x = features[:, 0, :].astype(jnp.bfloat16)                        # [B, H]
    x = jnp.pad(x, ((0, Bp - B), (0, 0)))                             # [Bp, H]
    w1 = w_dense.astype(jnp.bfloat16)                                 # [H, H] (no transpose)
    b1 = b_dense.reshape(1, H).astype(jnp.float32)                    # [1, H]
    w2 = jnp.pad(w_out, ((0, Lp - L), (0, 0))).astype(jnp.bfloat16)   # [Lp, H]
    b2 = jnp.pad(b_out, (0, Lp - L)).reshape(1, Lp).astype(jnp.float32)

    # VMEM budget: double-buffered x/W1 tiles + resident W2/biases/acc/out.
    vmem_bytes = (2 * Bp * TK * 2 + 2 * H * TK * 2      # x, W1 (double-buffered bf16)
                  + Lp * H * 2 + H * 4 + Lp * 4          # W2, b1, b2 (resident)
                  + Bp * H * 4 + 2 * Bp * Lp * 4)        # acc scratch, out (dbl-buf)
    vmem_limit = int(min(max(2 * vmem_bytes, 8 << 20), 32 << 20))

    cost = pl.CostEstimate(
        flops=2 * Bp * H * H + 2 * Bp * H * Lp,
        transcendentals=Bp * H,
        bytes_accessed=(H * H + Lp * H) * 2 + Bp * H * 2 + Bp * Lp * 4,
    )

    grid_spec = pltpu.PrefetchScalarGridSpec(
        num_scalar_prefetch=0,
        grid=(k_tiles,),
        in_specs=[
            pl.BlockSpec((Bp, TK), lambda k: (0, k)),   # x, K-tiled
            pl.BlockSpec((H, TK), lambda k: (0, k)),    # W1, K-tiled (streamed)
            pl.BlockSpec((1, H), lambda k: (0, 0)),     # b1 (resident)
            pl.BlockSpec((Lp, H), lambda k: (0, 0)),    # W2 (resident)
            pl.BlockSpec((1, Lp), lambda k: (0, 0)),    # b2 (resident)
        ],
        out_specs=pl.BlockSpec((Bp, Lp), lambda k: (0, 0)),
        scratch_shapes=[pltpu.VMEM((Bp, H), jnp.float32)],
    )

    out = pl.pallas_call(
        _head_kernel,
        out_shape=jax.ShapeDtypeStruct((Bp, Lp), jnp.float32),
        grid_spec=grid_spec,
        compiler_params=pltpu.CompilerParams(
            dimension_semantics=("arbitrary",),    # K is a reduction axis
            vmem_limit_bytes=vmem_limit,
        ),
        cost_estimate=cost,
    )(x, w1, b1, w2, b2)

    # TODO(synk): for large-batch inference add a leading "parallel" B-tile grid
    # axis so the 2 TensorCores (v7x) shard the work; a no-op at B=2 so omitted.
    return out[:B, :L].astype(features.dtype)


def _reference(features, w_dense, b_dense, w_out, b_out):
    # Same numerics as the kernel: bf16 weights/activations, f32 accumulation.
    x = features[:, 0, :].astype(jnp.bfloat16)
    w1 = w_dense.astype(jnp.bfloat16)
    w2 = w_out.astype(jnp.bfloat16)
    h = lax.dot_general(x, w1, (((1,), (1,)), ((), ())),
                        preferred_element_type=jnp.float32) + b_dense
    h = jnp.tanh(h)
    return lax.dot_general(h.astype(jnp.bfloat16), w2, (((1,), (1,)), ((), ())),
                           preferred_element_type=jnp.float32) + b_out


if __name__ == "__main__":
    # Small shapes consistent with the module's forward: [B, S, H] -> [B, L].
    B, S, H, L = 2, 8, 32, 4

    key = jax.random.PRNGKey(0)
    k_feat, k_w1, k_b1, k_w2, k_b2 = jax.random.split(key, 5)

    features = jax.random.normal(k_feat, (B, S, H), dtype=jnp.float32)
    # Deterministic synthetic parameters (shapes from nn.Linear in __init__).
    w_dense = jax.random.normal(k_w1, (H, H), dtype=jnp.float32) * 0.05
    b_dense = jax.random.normal(k_b1, (H,), dtype=jnp.float32) * 0.05
    w_out = jax.random.normal(k_w2, (L, H), dtype=jnp.float32) * 0.05
    b_out = jax.random.normal(k_b2, (L,), dtype=jnp.float32) * 0.05

    logits = tex_classification_head(features, w_dense, b_dense, w_out, b_out)
    logits = jax.block_until_ready(logits)

    ref = _reference(features, w_dense, b_dense, w_out, b_out)
    assert logits.shape == (B, L)
    assert jnp.allclose(logits, ref, atol=2e-2, rtol=2e-2), \
        float(jnp.max(jnp.abs(logits - ref)))

    # Looser sanity check against pure-f32 PyTorch math (bf16 weight rounding).
    x_cls = features[:, 0, :]
    ref_f32 = jnp.tanh(x_cls @ w_dense.T + b_dense) @ w_out.T + b_out
    assert jnp.allclose(logits, ref_f32, atol=5e-2, rtol=5e-2)

    print("KERNEL_OK")
</pallas_src>

<mosaic_0001>
module attributes {stable_mosaic.version = 11 : i64} {
  func.func @_head_kernel(%arg0: i32, %arg1: memref<8x32xbf16, #tpu.memory_space<vmem>>, %arg2: memref<32x32xbf16, #tpu.memory_space<vmem>>, %arg3: memref<1x32xf32, #tpu.memory_space<vmem>>, %arg4: memref<128x32xbf16, #tpu.memory_space<vmem>>, %arg5: memref<1x128xf32, #tpu.memory_space<vmem>>, %arg6: memref<8x128xf32, #tpu.memory_space<vmem>>, %arg7: memref<8x32xf32, #tpu.memory_space<vmem>>) attributes {dimension_semantics = [#tpu.dimension_semantics<arbitrary>], iteration_bounds = array<i64: 1>, scalar_prefetch = 0 : i64, scratch_operands = 1 : i64, tpu.core_type = #tpu.core_type<tc>, window_params = [{transform_indices = @transform_0, window_bounds = array<i64: 8, 32>}, {transform_indices = @transform_1, window_bounds = array<i64: 32, 32>}, {pipeline_mode = #tpu.pipeline_mode<synchronous>, transform_indices = @transform_2, window_bounds = array<i64: 1, 32>}, {pipeline_mode = #tpu.pipeline_mode<synchronous>, transform_indices = @transform_3, window_bounds = array<i64: 128, 32>}, {pipeline_mode = #tpu.pipeline_mode<synchronous>, transform_indices = @transform_4, window_bounds = array<i64: 1, 128>}, {pipeline_mode = #tpu.pipeline_mode<synchronous>, transform_indices = @transform_5, window_bounds = array<i64: 8, 128>}]} {
    %c0_i32 = arith.constant 0 : i32
    %0 = arith.cmpi eq, %arg0, %c0_i32 : i32
    %1 = arith.extui %0 : i1 to i32
    %c0_i32_0 = arith.constant 0 : i32
    %2 = arith.cmpi ne, %1, %c0_i32_0 : i32
    scf.if %2 {
      %cst_10 = arith.constant 0.000000e+00 : f32
      %12 = vector.broadcast %cst_10 : f32 to vector<8x32xf32>
      %c0_11 = arith.constant 0 : index
      %c0_12 = arith.constant 0 : index
      %13 = vector.load %arg7[%c0_11, %c0_12] : memref<8x32xf32, #tpu.memory_space<vmem>>, vector<8x32xf32>
      tpu.vector_store %arg7[%c0_11, %c0_12], %12 {strides = array<i32>} : memref<8x32xf32, #tpu.memory_space<vmem>>, vector<8x32xf32>,
    } else {
    }
    %c0 = arith.constant 0 : index
    %c0_1 = arith.constant 0 : index
    %3 = vector.load %arg7[%c0, %c0_1] : memref<8x32xf32, #tpu.memory_space<vmem>>, vector<8x32xf32>
    %c0_2 = arith.constant 0 : index
    %c0_3 = arith.constant 0 : index
    %4 = vector.load %arg1[%c0_2, %c0_3] : memref<8x32xbf16, #tpu.memory_space<vmem>>, vector<8x32xbf16>
    %c0_4 = arith.constant 0 : index
    %c0_5 = arith.constant 0 : index
    %5 = vector.load %arg2[%c0_4, %c0_5] : memref<32x32xbf16, #tpu.memory_space<vmem>>, vector<32x32xbf16>
    %cst = arith.constant dense<0.000000e+00> : vector<8x32xf32>
    %6 = tpu.matmul %4, %5, %cst {dimension_numbers = #tpu.dot_dimension_numbers<[1], [1], [0], [0], [0, 0, 1, 0], [], []>} : vector<8x32xbf16>, vector<32x32xbf16>, vector<8x32xf32> -> vector<8x32xf32>
    %7 = arith.addf %3, %6 : vector<8x32xf32>
    %c0_6 = arith.constant 0 : index
    %c0_7 = arith.constant 0 : index
    %8 = vector.load %arg7[%c0_6, %c0_7] : memref<8x32xf32, #tpu.memory_space<vmem>>, vector<8x32xf32>
    tpu.vector_store %arg7[%c0_6, %c0_7], %7 {strides = array<i32>} : memref<8x32xf32, #tpu.memory_space<vmem>>, vector<8x32xf32>,
    %c0_i32_8 = arith.constant 0 : i32
    %9 = arith.cmpi eq, %arg0, %c0_i32_8 : i32
    %10 = arith.extui %9 : i1 to i32
    %c0_i32_9 = arith.constant 0 : i32
    %11 = arith.cmpi ne, %10, %c0_i32_9 : i32
    scf.if %11 {
      %c0_10 = arith.constant 0 : index
      %c0_11 = arith.constant 0 : index
      %12 = vector.load %arg7[%c0_10, %c0_11] : memref<8x32xf32, #tpu.memory_space<vmem>>, vector<8x32xf32>
      %c0_12 = arith.constant 0 : index
      %c0_13 = arith.constant 0 : index
      %13 = vector.load %arg3[%c0_12, %c0_13] : memref<1x32xf32, #tpu.memory_space<vmem>>, vector<1x32xf32>
      %14 = vector.broadcast %13 : vector<1x32xf32> to vector<8x32xf32>
      %15 = arith.addf %12, %14 : vector<8x32xf32>
      %16 = math.tanh %15 : vector<8x32xf32>
      %17 = arith.truncf %16 : vector<8x32xf32> to vector<8x32xbf16>
      %c0_14 = arith.constant 0 : index
      %c0_15 = arith.constant 0 : index
      %18 = vector.load %arg4[%c0_14, %c0_15] : memref<128x32xbf16, #tpu.memory_space<vmem>>, vector<128x32xbf16>
      %cst_16 = arith.constant dense<0.000000e+00> : vector<8x128xf32>
      %19 = tpu.matmul %17, %18, %cst_16 {dimension_numbers = #tpu.dot_dimension_numbers<[1], [1], [0], [0], [0, 0, 1, 0], [], []>} : vector<8x32xbf16>, vector<128x32xbf16>, vector<8x128xf32> -> vector<8x128xf32>
      %c0_17 = arith.constant 0 : index
      %c0_18 = arith.constant 0 : index
      %20 = vector.load %arg5[%c0_17, %c0_18] : memref<1x128xf32, #tpu.memory_space<vmem>>, vector<1x128xf32>
      %21 = vector.broadcast %20 : vector<1x128xf32> to vector<8x128xf32>
      %22 = arith.addf %19, %21 : vector<8x128xf32>
      %c0_19 = arith.constant 0 : index
      %c0_20 = arith.constant 0 : index
      %23 = vector.load %arg6[%c0_19, %c0_20] : memref<8x128xf32, #tpu.memory_space<vmem>>, vector<8x128xf32>
      tpu.vector_store %arg6[%c0_19, %c0_20], %22 {strides = array<i32>} : memref<8x128xf32, #tpu.memory_space<vmem>>, vector<8x128xf32>,
    } else {
    }
    return
  }
  func.func @transform_0(%arg0: i32) -> (i32, i32) {
    %c0_i32 = arith.constant 0 : i32
    %c0_i32_0 = arith.constant 0 : i32
    return %c0_i32, %arg0 : i32, i32
  }
  func.func @transform_1(%arg0: i32) -> (i32, i32) {
    %c0_i32 = arith.constant 0 : i32
    %c0_i32_0 = arith.constant 0 : i32
    return %c0_i32, %arg0 : i32, i32
  }
  func.func @transform_2(%arg0: i32) -> (i32, i32) {
    %c0_i32 = arith.constant 0 : i32
    %c0_i32_0 = arith.constant 0 : i32
    %c0_i32_1 = arith.constant 0 : i32
    return %c0_i32, %c0_i32_0 : i32, i32
  }
  func.func @transform_3(%arg0: i32) -> (i32, i32) {
    %c0_i32 = arith.constant 0 : i32
    %c0_i32_0 = arith.constant 0 : i32
    %c0_i32_1 = arith.constant 0 : i32
    return %c0_i32, %c0_i32_0 : i32, i32
  }
  func.func @transform_4(%arg0: i32) -> (i32, i32) {
    %c0_i32 = arith.constant 0 : i32
    %c0_i32_0 = arith.constant 0 : i32
    %c0_i32_1 = arith.constant 0 : i32
    return %c0_i32, %c0_i32_0 : i32, i32
  }
  func.func @transform_5(%arg0: i32) -> (i32, i32) {
    %c0_i32 = arith.constant 0 : i32
    %c0_i32_0 = arith.constant 0 : i32
    %c0_i32_1 = arith.constant 0 : i32
    return %c0_i32, %c0_i32_0 : i32, i32
  }
}

</mosaic_0001>

<llo_original>
// kernel: tpu_custom_call.1
$region0: #{tpu_custom_call.1}
  #allocation0 [shape = 'u32[]', space=smem, size = 0x4, offset = 0x4, fixed_abs, tag = 'smem constant byte address 0x4 - core index']
  #allocation1 [shape = 'u32[144,128]{1,0:T(1,128)}', space=vmem, size = 0x12000, scoped, tag = 'internal scratch']
  #allocation2 [shape = 'f32[8,32]{1,0:T(8,128)}', space=vmem, size = 0x1000, scoped, tag = 'scratch operand']
  %s0 = inlined_call_operand.vmem [shape: bf16[8,32], index: 0, kind: input, shape index: {}]
  %s1 = inlined_call_operand.vmem [shape: bf16[32,32], index: 1, kind: input, shape index: {}]
  %s2 = inlined_call_operand.vmem [shape: f32[1,32], index: 2, kind: input, shape index: {}]
  %s3 = inlined_call_operand.vmem [shape: bf16[128,32], index: 3, kind: input, shape index: {}]
  %s4 = inlined_call_operand.vmem [shape: f32[1,128], index: 4, kind: input, shape index: {}]
  %s5 = inlined_call_operand.hbm [shape: f32[8,128], index: 5, kind: output, shape index: {}]
  %s6 = sld [smem:[#allocation0]]
  $region38: #{tpu_custom_call.1} parent=0
    _
  %s8 = ssub.s32 1, %s6
  %s9 = scalar_select 0, %s8, %s6
  $region1: #{tpu_custom_call.1} parent=0
    #allocation3 [shape = 'u8[4096]{0}', space=vmem, size = 0x1000, scoped, tag = 'output window, operand 0, single buffered']
    #allocation4 [shape = 's32[1]{0}', space=sflag, size = 0x4, scoped, tag = 'scoped memory for tpu_custom_call.1']
    %10 = vsyncpa [#allocation4], 0
    // Predicated region
    $region2: #{tpu_custom_call.1} parent=1 // pred_check
      _
    $region3: #{tpu_custom_call.1} parent=1 // pred_check_branch
      %12 = sbr.rel (0) target = $region5
    $region4: #{tpu_custom_call.1} parent=1 // pred_region
      _
    $region5: #{tpu_custom_call.1} parent=1 // pred_fallthru
      _
    // Predicated region
    $region6: #{tpu_custom_call.1} parent=1 // pred_check
      _
    $region7: #{tpu_custom_call.1} parent=1 // pred_check_branch
      %14 = sbr.rel (0) target = $region9
    $region8: #{tpu_custom_call.1} parent=1 // pred_region
      _
    $region9: #{tpu_custom_call.1} parent=1 // pred_fallthru
      _
    // Predicated region
    $region10: #{tpu_custom_call.1} parent=1 // pred_check
      _
    $region11: #{tpu_custom_call.1} parent=1 // pred_check_branch
      %16 = sbr.rel (0) target = $region13
    $region12: #{tpu_custom_call.1} parent=1 // pred_region
      _
    $region13: #{tpu_custom_call.1} parent=1 // pred_fallthru
      _
    // Predicated region
    $region14: #{tpu_custom_call.1} parent=1 // pred_check
      _
    $region15: #{tpu_custom_call.1} parent=1 // pred_check_branch
      %18 = sbr.rel (0) target = $region17
    $region16: #{tpu_custom_call.1} parent=1 // pred_region
      _
    $region17: #{tpu_custom_call.1} parent=1 // pred_fallthru
      _
    // Predicated region
    $region18: #{tpu_custom_call.1} parent=1 // pred_check
      _
    $region19: #{tpu_custom_call.1} parent=1 // pred_check_branch
      %20 = sbr.rel (0) target = $region21
    $region20: #{tpu_custom_call.1} parent=1 // pred_region
      _
    $region21: #{tpu_custom_call.1} parent=1 // pred_fallthru
      _
    %p22 = scmp.eq.s32.totalorder 0, 0
    // Predicated region
    $region22: #{tpu_custom_call.1} parent=1 // pred_check
      %p23 = pneg %p22
    $region23: #{tpu_custom_call.1} parent=1 // pred_check_branch
      %25 = sbr.rel (%p23) target = $region25
    $region24: #{tpu_custom_call.1} parent=1 // pred_region
      %vm26 = vcmask 261120
      %27 = vst.msk [vmem:[#allocation2] sm:$0xff] %vm26, 0.0
    $region25: #{tpu_custom_call.1} parent=1 // pred_fallthru
      _
    %v28 = vld [vmem:[#allocation2] sm:$0xff]
    %v29 = vld [vmem:[%s0] sm:$0xf]
    %v30 = vld [vmem:[%s1] sm:$0xf]
    %v31 = vld [vmem:[%s1 + $0x4] sm:$0xf]
    %v32 = vld [vmem:[%s1 + $0x8] sm:$0xf]
    %v33 = vld [vmem:[%s1 + $0xc] sm:$0xf]
    %v38 = vunpack.c.l.b16 %v30
    %v39 = vunpack.c.l.b16 %v31
    %v40 = vunpack.c.l.b16 %v32
    %v41 = vunpack.c.l.b16 %v33
    %v42 = vpack.c.b16 %v39, %v38
    %v43 = vpack.c.b16 %v41, %v40
    %vm44 = vcmask 261120
    %v46 = vsel %vm44, %v29, 0
    %v49 = vsel %vm44, %v42, 0
    %v52 = vsel %vm44, %v43, 0
    %54 = vmatprep.subr.bf16.mxu0 0
    %55 = vmatpush1.bf16.xpose.msra.mxu0 %v49
    %56 = vmatprep.subr.bf16.mxu0 0
    %57 = vmatpush1.bf16.xpose.msra.mxu0 %v52
    %58 = vmatprep.subr.bf16.mxu0 0
    %59 = vmatpush1.bf16.xpose.msra.mxu0 0
    %60 = vmatprep.subr.bf16.mxu0 0
    %61 = vmatpush1.bf16.xpose.msra.mxu0 0
    %62 = vmatprep.subr.bf16.mxu0 0
    %63 = vmatpush1.bf16.xpose.msra.mxu0 0
    %64 = vmatprep.subr.bf16.mxu0 0
    %65 = vmatpush1.bf16.xpose.msra.mxu0 0
    %66 = vmatprep.subr.bf16.mxu0 0
    %67 = vmatpush1.bf16.xpose.msra.mxu0 0
    %68 = vmatprep.subr.bf16.mxu0 0
    %69 = vmatpush1.bf16.xpose.msra.mxu0 0
    %70 = vmatprep.subr.bf16.mxu0 0
    %71 = vmatpush1.bf16.xpose.msra.mxu0 0
    %72 = vmatprep.subr.bf16.mxu0 0
    %73 = vmatpush1.bf16.xpose.msra.mxu0 0
    %74 = vmatprep.subr.bf16.mxu0 0
    %75 = vmatpush1.bf16.xpose.msra.mxu0 0
    %76 = vmatprep.subr.bf16.mxu0 0
    %77 = vmatpush1.bf16.xpose.msra.mxu0 0
    %78 = vmatprep.subr.bf16.mxu0 0
    %79 = vmatpush1.bf16.xpose.msra.mxu0 0
    %80 = vmatprep.subr.bf16.mxu0 0
    %81 = vmatpush1.bf16.xpose.msra.mxu0 0
    %82 = vmatprep.subr.bf16.mxu0 0
    %83 = vmatpush1.bf16.xpose.msra.mxu0 0
    %84 = vmatprep.subr.bf16.mxu0 0
    %85 = vmatpush1.bf16.xpose.msra.mxu0 0
    %86 = vmatprep.mubr.bf16.mxu0 0
    %87 = vmatmul.mubr.bf16.gmra.mrb[0].mxu0 %v46
    %v88 = vpop.f32.mrb[0].mxu0
    %v89 = vadd.f32 0.0, %v88
    %v90 = vpop.f32.mrb[0].mxu0
    %v91 = vpop.f32.mrb[0].mxu0
    %v92 = vpop.f32.mrb[0].mxu0
    %93 = vdwg.mxu0
    %v94 = vadd.f32 %v28, %v89
    %95 = vst.msk [vmem:[#allocation2] sm:$0xff] %vm44, %v94
    // Predicated region
    $region26: #{tpu_custom_call.1} parent=1 // pred_check
      %p96 = pneg %p22
    $region27: #{tpu_custom_call.1} parent=1 // pred_check_branch
      %98 = sbr.rel (%p96) target = $region29
    $region28: #{tpu_custom_call.1} parent=1 // pred_region
      %v99 = vld [vmem:[#allocation2] sm:$0xff]
      %v100 = vld [vmem:[%s2] sm:$0x1]
      %v102 = vlaneseq
      %v103 = vshrl.u32 %v102, 7
      %v104 = vsub.s32 0, %v103
      %v105 = vrot.slane %v100, %v104
      %v107 = vadd.f32 %v99, %v105
      %v108 = vtanh.pop %v107
      %v109 = vpack.c.bf16 %v108, %v108
      %v110 = vld [vmem:[%s3] sm:$0xf]
      %v111 = vld [vmem:[%s3 + $0x4] sm:$0xf]
      %v112 = vld [vmem:[%s3 + $0x8] sm:$0xf]
      %v113 = vld [vmem:[%s3 + $0xc] sm:$0xf]
      %v114 = vld [vmem:[%s3 + $0x10] sm:$0xf]
      %v115 = vld [vmem:[%s3 + $0x14] sm:$0xf]
      %v116 = vld [vmem:[%s3 + $0x18] sm:$0xf]
      %v117 = vld [vmem:[%s3 + $0x1c] sm:$0xf]
      %v118 = vld [vmem:[%s3 + $0x20] sm:$0xf]
      %v119 = vld [vmem:[%s3 + $0x24] sm:$0xf]
      %v120 = vld [vmem:[%s3 + $0x28] sm:$0xf]
      %v121 = vld [vmem:[%s3 + $0x2c] sm:$0xf]
      %v122 = vld [vmem:[%s3 + $0x30] sm:$0xf]
      %v123 = vld [vmem:[%s3 + $0x34] sm:$0xf]
      %v124 = vld [vmem:[%s3 + $0x38] sm:$0xf]
      %v125 = vld [vmem:[%s3 + $0x3c] sm:$0xf]
      %v126 = vld [vmem:[%s4] sm:$0x1]
      %v128 = vlaneseq
      %v129 = vshrl.u32 %v128, 7
      %v130 = vsub.s32 0, %v129
      %v131 = vrot.slane %v126, %v130
      %v149 = vunpack.c.l.b16 %v110
      %v150 = vunpack.c.l.b16 %v111
      %v151 = vunpack.c.l.b16 %v112
      %v152 = vunpack.c.l.b16 %v113
      %v153 = vunpack.c.l.b16 %v114
      %v154 = vunpack.c.l.b16 %v115
      %v155 = vunpack.c.l.b16 %v116
      %v156 = vunpack.c.l.b16 %v117
      %v157 = vunpack.c.l.b16 %v118
      %v158 = vunpack.c.l.b16 %v119
      %v159 = vunpack.c.l.b16 %v120
      %v160 = vunpack.c.l.b16 %v121
      %v161 = vunpack.c.l.b16 %v122
      %v162 = vunpack.c.l.b16 %v123
      %v163 = vunpack.c.l.b16 %v124
      %v164 = vunpack.c.l.b16 %v125
      %v165 = vpack.c.b16 %v150, %v149
      %v166 = vpack.c.b16 %v152, %v151
      %v167 = vpack.c.b16 %v154, %v153
      %v168 = vpack.c.b16 %v156, %v155
      %v169 = vpack.c.b16 %v158, %v157
      %v170 = vpack.c.b16 %v160, %v159
      %v171 = vpack.c.b16 %v162, %v161
      %v172 = vpack.c.b16 %v164, %v163
      %v174 = vsel %vm44, %v109, 0
      %v177 = vsel %vm44, %v165, 0
      %v180 = vsel %vm44, %v166, 0
      %v183 = vsel %vm44, %v167, 0
      %v186 = vsel %vm44, %v168, 0
      %v189 = vsel %vm44, %v169, 0
      %v192 = vsel %vm44, %v170, 0
      %v195 = vsel %vm44, %v171, 0
      %v198 = vsel %vm44, %v172, 0
      %200 = vmatprep.subr.bf16.mxu0 0
      %201 = vmatpush1.bf16.xpose.msra.mxu0 %v177
      %202 = vmatprep.subr.bf16.mxu0 0
      %203 = vmatpush1.bf16.xpose.msra.mxu0 %v180
      %204 = vmatprep.subr.bf16.mxu0 0
      %205 = vmatpush1.bf16.xpose.msra.mxu0 %v183
      %206 = vmatprep.subr.bf16.mxu0 0
      %207 = vmatpush1.bf16.xpose.msra.mxu0 %v186
      %208 = vmatprep.subr.bf16.mxu0 0
      %209 = vmatpush1.bf16.xpose.msra.mxu0 %v189
      %210 = vmatprep.subr.bf16.mxu0 0
      %211 = vmatpush1.bf16.xpose.msra.mxu0 %v192
      %212 = vmatprep.subr.bf16.mxu0 0
      %213 = vmatpush1.bf16.xpose.msra.mxu0 %v195
      %214 = vmatprep.subr.bf16.mxu0 0
      %215 = vmatpush1.bf16.xpose.msra.mxu0 %v198
      %216 = vmatprep.subr.bf16.mxu0 0
      %217 = vmatpush1.bf16.xpose.msra.mxu0 0
      %218 = vmatprep.subr.bf16.mxu0 0
      %219 = vmatpush1.bf16.xpose.msra.mxu0 0
      %220 = vmatprep.subr.bf16.mxu0 0
      %221 = vmatpush1.bf16.xpose.msra.mxu0 0
      %222 = vmatprep.subr.bf16.mxu0 0
      %223 = vmatpush1.bf16.xpose.msra.mxu0 0
      %224 = vmatprep.subr.bf16.mxu0 0
      %225 = vmatpush1.bf16.xpose.msra.mxu0 0
      %226 = vmatprep.subr.bf16.mxu0 0
      %227 = vmatpush1.bf16.xpose.msra.mxu0 0
      %228 = vmatprep.subr.bf16.mxu0 0
      %229 = vmatpush1.bf16.xpose.msra.mxu0 0
      %230 = vmatprep.subr.bf16.mxu0 0
      %231 = vmatpush1.bf16.xpose.msra.mxu0 0
      %232 = vmatprep.mubr.bf16.mxu0 0
      %233 = vmatmul.mubr.bf16.gmra.mrb[0].mxu0 %v174
      %v234 = vpop.f32.mrb[0].mxu0
      %v235 = vadd.f32 %v131, %v234
      %v236 = vpop.f32.mrb[0].mxu0
      %v237 = vpop.f32.mrb[0].mxu0
      %v238 = vpop.f32.mrb[0].mxu0
      %239 = vdwg.mxu0
      %240 = vst [vmem:[#allocation3] sm:$0xff] %v235
    $region29: #{tpu_custom_call.1} parent=1 // pred_fallthru
      _
    // Predicated region
    $region30: #{tpu_custom_call.1} parent=1 // pred_check
      _
    $region31: #{tpu_custom_call.1} parent=1 // pred_check_branch
      %242 = sbr.rel (0) target = $region33
    $region32: #{tpu_custom_call.1} parent=1 // pred_region
      %s244 = ssub.s32 128, 128
      %245 = vsyncadd [#allocation4], %s244
      %s247 = sshll.u32 [#allocation3], 4
      %s248 = int_to_ptr.vmem [resolvable:$true] %s247
      %250 = dma.vmem_to_hbm [thread:$0]  %s248, 128, %s5, [#allocation4]
    $region33: #{tpu_custom_call.1} parent=1 // pred_fallthru
      _
    // Predicated region
    $region34: #{tpu_custom_call.1} parent=1 // pred_check
      _
    $region35: #{tpu_custom_call.1} parent=1 // pred_check_branch
      %252 = sbr.rel (0) target = $region37
    $region36: #{tpu_custom_call.1} parent=1 // pred_region
      %253 = dma.done [#allocation4], 128
    $region37: #{tpu_custom_call.1} parent=1 // pred_fallthru
      _
    %254 = vsyncpa [#allocation4], 1

</llo_original>
